<compile_context>
chip_gen: v7x
topology: tpu7x:2x2x1
jax: 0.10.0
libtpu: 0.0.40
codegen_flags: <defaults>
</compile_context>

<pallas_src>
import functools

import jax
import jax.numpy as jnp
from jax.experimental import pallas as pl
from jax.experimental.pallas import tpu as pltpu


def _round_up(x, m):
    return (x + m - 1) // m * m


def mlp_kernel(x_ref, w1_ref, b1_ref, w2_ref, b2_ref, o_ref, *, feat_dim, valid_out):
    # Transposed layout: batch lives on the lane axis.
    #   x_ref : (F,   bm)   input^T tile
    #   w1_ref: (Hp,  F)    layer-1 weight^T (zero-padded hidden)
    #   b1_ref: (Hp,  1)
    #   w2_ref: (Op8, Hp)   layer-2 weight^T (zero-padded out dim -> 8)
    #   b2_ref: (Op8, 1)
    #   o_ref : (Op8, bm)   softmax probabilities^T (lane-dense store)
    x = x_ref[...]

    # ---- Layer 1: Linear + ReLU ----
    if feat_dim == 1:
        # K=1 contraction as a VPU broadcast outer product (no MXU round-trip).
        h = w1_ref[...] * x + b1_ref[...]          # (Hp,1)*(1,bm) -> (Hp,bm)
    else:
        h = jnp.dot(w1_ref[...], x, preferred_element_type=jnp.float32) + b1_ref[...]
    h = jnp.maximum(h, 0.0)

    # ---- Layer 2: Linear + ReLU  (tiny (Op8,Hp)x(Hp,bm) MXU GEMM, f32 acc) ----
    z = jnp.dot(w2_ref[...], h, preferred_element_type=jnp.float32) + b2_ref[...]
    z = jnp.maximum(z, 0.0)                        # (Op8, bm)

    # ---- Softmax over the valid logit rows (sublane axis) ----
    # Padded rows carry ReLU(0) = 0 logits; mask to -inf so they contribute
    # nothing to max or the denominator (exp(-inf) == 0 exactly).
    row = jax.lax.broadcasted_iota(jnp.int32, z.shape, dimension=0)
    z = jnp.where(row < valid_out, z, -jnp.inf)
    z = z - jnp.max(z, axis=0, keepdims=True)
    e = jnp.exp(z)
    denom = jnp.sum(e, axis=0, keepdims=True)
    o_ref[...] = e / denom                         # exact divide (EUP not binding)


def prepare_params(w1, b1, w2, b2):
    """Pad / transpose params once (hoisted out of the per-call path).

    w1: (F, H), b1: (H,), w2: (H, O), b2: (O,)  — weights stored as (in, out).
    Returns kernel-layout params: w1^T (Hp,F), b1 (Hp,1), w2^T (Op8,Hp), b2 (Op8,1).
    Zero padding is exact: ReLU(0)=0 and zero weight rows contribute nothing.
    """
    F, H = w1.shape
    O = w2.shape[1]
    Hp = _round_up(H, 128)   # hidden = layer-2 contraction dim -> MXU-native 128
    Op8 = _round_up(O, 8)    # logits live on sublanes -> pad only to 8
    f32 = jnp.float32
    w1t = jnp.zeros((Hp, F), f32).at[:H, :].set(w1.astype(f32).T)
    b1t = jnp.zeros((Hp, 1), f32).at[:H, 0].set(b1.astype(f32))
    w2t = jnp.zeros((Op8, Hp), f32).at[:O, :H].set(w2.astype(f32).T)
    b2t = jnp.zeros((Op8, 1), f32).at[:O, 0].set(b2.astype(f32))
    return w1t, b1t, w2t, b2t


@functools.partial(jax.jit, static_argnames=("out_dim", "block_m"))
def mlp_forward(x, w1t, b1t, w2t, b2t, *, out_dim, block_m=4096):
    """x: (B, F) f32; params from prepare_params(). Returns (B, out_dim) softmax."""
    B, F = x.shape
    Hp = w1t.shape[0]
    Op8 = w2t.shape[0]
    f32 = jnp.float32

    # Batch on the lane axis (free reshape-transpose when F == 1).
    xT = x.astype(f32).T                           # (F, B)

    # Batch tile: big blocks amortize the ~0.35 us per-grid-step overhead; split
    # at least 2 ways when possible so both v7x TensorCores get work. Trailing
    # ragged block (bm not dividing B) is handled by Pallas with masked writes.
    bm = min(block_m, _round_up(B, 128))
    if B >= 256:
        bm = min(bm, _round_up(pl.cdiv(B, 2), 128))
    grid_b = pl.cdiv(B, bm)

    kernel = functools.partial(mlp_kernel, feat_dim=F, valid_out=out_dim)

    out_t = pl.pallas_call(
        kernel,
        out_shape=jax.ShapeDtypeStruct((Op8, B), f32),
        grid_spec=pltpu.PrefetchScalarGridSpec(
            num_scalar_prefetch=0,
            grid=(grid_b,),
            in_specs=[
                pl.BlockSpec((F, bm), lambda i: (0, i)),     # x^T: tiled over batch lanes
                pl.BlockSpec((Hp, F), lambda i: (0, 0)),     # w1^T: VMEM resident
                pl.BlockSpec((Hp, 1), lambda i: (0, 0)),     # b1
                pl.BlockSpec((Op8, Hp), lambda i: (0, 0)),   # w2^T
                pl.BlockSpec((Op8, 1), lambda i: (0, 0)),    # b2
            ],
            out_specs=pl.BlockSpec((Op8, bm), lambda i: (0, i)),
        ),
        compiler_params=pltpu.CompilerParams(
            dimension_semantics=("parallel",),  # batch axis -> both TCs on v7x
        ),
    )(xT, w1t, b1t, w2t, b2t)

    # (Op8, B) -> (B, out_dim): strip sublane padding, restore row-major batch.
    return out_t[:out_dim, :].T


if __name__ == "__main__":
    feat_dim, out_dim, hidden_dim = 1, 2, 100
    batch = 8

    key = jax.random.PRNGKey(0)
    kx, kw1, kb1, kw2, kb2 = jax.random.split(key, 5)

    # Deterministic init (uniform in +/- 1/sqrt(fan_in), like torch Linear).
    bound1 = 1.0 / (feat_dim ** 0.5)
    bound2 = 1.0 / (hidden_dim ** 0.5)
    w1 = jax.random.uniform(kw1, (feat_dim, hidden_dim), jnp.float32, -bound1, bound1)
    b1 = jax.random.uniform(kb1, (hidden_dim,), jnp.float32, -bound1, bound1)
    w2 = jax.random.uniform(kw2, (hidden_dim, out_dim), jnp.float32, -bound2, bound2)
    b2 = jax.random.uniform(kb2, (out_dim,), jnp.float32, -bound2, bound2)

    x = jax.random.normal(kx, (batch, feat_dim), jnp.float32)

    # Pad/transpose params once (not per forward call).
    w1t, b1t, w2t, b2t = prepare_params(w1, b1, w2, b2)

    out = mlp_forward(x, w1t, b1t, w2t, b2t, out_dim=out_dim)
    jax.block_until_ready(out)

    # Reference in plain JAX (highest-precision matmuls); tolerance tightened
    # now that the softmax uses an exact divide.
    hi = jax.lax.Precision.HIGHEST
    h_ref = jnp.maximum(jnp.dot(x, w1, precision=hi) + b1[None, :], 0.0)
    z_ref = jnp.maximum(jnp.dot(h_ref, w2, precision=hi) + b2[None, :], 0.0)
    ref = jax.nn.softmax(z_ref, axis=-1)

    assert out.shape == (batch, out_dim)
    assert jnp.allclose(out, ref, atol=1e-4, rtol=1e-4), "mismatch vs reference"

    print("KERNEL_OK")
</pallas_src>

<mosaic_0001>
module attributes {stable_mosaic.version = 11 : i64} {
  func.func @mlp_kernel(%arg0: i32, %arg1: memref<1x128xf32, #tpu.memory_space<vmem>>, %arg2: memref<128x1xf32, #tpu.memory_space<vmem>>, %arg3: memref<128x1xf32, #tpu.memory_space<vmem>>, %arg4: memref<8x128xf32, #tpu.memory_space<vmem>>, %arg5: memref<8x1xf32, #tpu.memory_space<vmem>>, %arg6: memref<8x128xf32, #tpu.memory_space<vmem>>) attributes {dimension_semantics = [#tpu.dimension_semantics<parallel>], iteration_bounds = array<i64: 1>, scalar_prefetch = 0 : i64, scratch_operands = 0 : i64, tpu.core_type = #tpu.core_type<tc>, window_params = [{transform_indices = @transform_0, window_bounds = array<i64: 1, 128>}, {pipeline_mode = #tpu.pipeline_mode<synchronous>, transform_indices = @transform_1, window_bounds = array<i64: 128, 1>}, {pipeline_mode = #tpu.pipeline_mode<synchronous>, transform_indices = @transform_2, window_bounds = array<i64: 128, 1>}, {pipeline_mode = #tpu.pipeline_mode<synchronous>, transform_indices = @transform_3, window_bounds = array<i64: 8, 128>}, {pipeline_mode = #tpu.pipeline_mode<synchronous>, transform_indices = @transform_4, window_bounds = array<i64: 8, 1>}, {transform_indices = @transform_5, window_bounds = array<i64: 8, 128>}]} {
    %c0 = arith.constant 0 : index
    %c0_0 = arith.constant 0 : index
    %0 = vector.load %arg1[%c0, %c0_0] : memref<1x128xf32, #tpu.memory_space<vmem>>, vector<1x128xf32>
    %c0_1 = arith.constant 0 : index
    %c0_2 = arith.constant 0 : index
    %1 = vector.load %arg2[%c0_1, %c0_2] : memref<128x1xf32, #tpu.memory_space<vmem>>, vector<128x1xf32>
    %2 = vector.broadcast %1 : vector<128x1xf32> to vector<128x128xf32>
    %3 = vector.broadcast %0 : vector<1x128xf32> to vector<128x128xf32>
    %4 = arith.mulf %2, %3 : vector<128x128xf32>
    %c0_3 = arith.constant 0 : index
    %c0_4 = arith.constant 0 : index
    %5 = vector.load %arg3[%c0_3, %c0_4] : memref<128x1xf32, #tpu.memory_space<vmem>>, vector<128x1xf32>
    %6 = vector.broadcast %5 : vector<128x1xf32> to vector<128x128xf32>
    %7 = arith.addf %4, %6 : vector<128x128xf32>
    %cst = arith.constant 0.000000e+00 : f32
    %8 = vector.broadcast %cst : f32 to vector<128x128xf32>
    %9 = arith.maximumf %7, %8 : vector<128x128xf32>
    %c0_5 = arith.constant 0 : index
    %c0_6 = arith.constant 0 : index
    %10 = vector.load %arg4[%c0_5, %c0_6] : memref<8x128xf32, #tpu.memory_space<vmem>>, vector<8x128xf32>
    %cst_7 = arith.constant dense<0.000000e+00> : vector<8x128xf32>
    %11 = tpu.matmul %10, %9, %cst_7 {dimension_numbers = #tpu.dot_dimension_numbers<[1], [0], [0], [1], [0, 0, 1, 1], [], []>} : vector<8x128xf32>, vector<128x128xf32>, vector<8x128xf32> -> vector<8x128xf32>
    %c0_8 = arith.constant 0 : index
    %c0_9 = arith.constant 0 : index
    %12 = vector.load %arg5[%c0_8, %c0_9] : memref<8x1xf32, #tpu.memory_space<vmem>>, vector<8x1xf32>
    %13 = vector.broadcast %12 : vector<8x1xf32> to vector<8x128xf32>
    %14 = arith.addf %11, %13 : vector<8x128xf32>
    %cst_10 = arith.constant 0.000000e+00 : f32
    %15 = vector.broadcast %cst_10 : f32 to vector<8x128xf32>
    %16 = arith.maximumf %14, %15 : vector<8x128xf32>
    %17 = tpu.iota {dimensions = array<i32: 0>} : vector<8x128xi32>
    %c2_i32 = arith.constant 2 : i32
    %18 = vector.broadcast %c2_i32 : i32 to vector<8x128xi32>
    %19 = arith.cmpi slt, %17, %18 : vector<8x128xi32>
    %cst_11 = arith.constant 0xFF800000 : f32
    %20 = vector.broadcast %cst_11 : f32 to vector<8x128xf32>
    %21 = arith.select %19, %16, %20 : vector<8x128xi1>, vector<8x128xf32>
    %cst_12 = arith.constant dense<0xFF800000> : vector<128xf32>
    %22 = vector.multi_reduction <maximumf>, %21, %cst_12 [0] : vector<8x128xf32> to vector<128xf32>
    %23 = vector.shape_cast %22 : vector<128xf32> to vector<1x128xf32>
    %24 = vector.broadcast %23 : vector<1x128xf32> to vector<8x128xf32>
    %25 = arith.subf %21, %24 : vector<8x128xf32>
    %26 = math.exp %25 : vector<8x128xf32>
    %cst_13 = arith.constant dense<0.000000e+00> : vector<128xf32>
    %27 = vector.multi_reduction <add>, %26, %cst_13 [0] : vector<8x128xf32> to vector<128xf32>
    %28 = vector.shape_cast %27 : vector<128xf32> to vector<1x128xf32>
    %29 = vector.broadcast %28 : vector<1x128xf32> to vector<8x128xf32>
    %30 = arith.divf %26, %29 : vector<8x128xf32>
    %c0_14 = arith.constant 0 : index
    %c0_15 = arith.constant 0 : index
    %31 = vector.load %arg6[%c0_14, %c0_15] : memref<8x128xf32, #tpu.memory_space<vmem>>, vector<8x128xf32>
    tpu.vector_store %arg6[%c0_14, %c0_15], %30 {strides = array<i32>} : memref<8x128xf32, #tpu.memory_space<vmem>>, vector<8x128xf32>,
    return
  }
  func.func @transform_0(%arg0: i32) -> (i32, i32) {
    %c0_i32 = arith.constant 0 : i32
    %c0_i32_0 = arith.constant 0 : i32
    return %c0_i32, %arg0 : i32, i32
  }
  func.func @transform_1(%arg0: i32) -> (i32, i32) {
    %c0_i32 = arith.constant 0 : i32
    %c0_i32_0 = arith.constant 0 : i32
    %c0_i32_1 = arith.constant 0 : i32
    return %c0_i32, %c0_i32_0 : i32, i32
  }
  func.func @transform_2(%arg0: i32) -> (i32, i32) {
    %c0_i32 = arith.constant 0 : i32
    %c0_i32_0 = arith.constant 0 : i32
    %c0_i32_1 = arith.constant 0 : i32
    return %c0_i32, %c0_i32_0 : i32, i32
  }
  func.func @transform_3(%arg0: i32) -> (i32, i32) {
    %c0_i32 = arith.constant 0 : i32
    %c0_i32_0 = arith.constant 0 : i32
    %c0_i32_1 = arith.constant 0 : i32
    return %c0_i32, %c0_i32_0 : i32, i32
  }
  func.func @transform_4(%arg0: i32) -> (i32, i32) {
    %c0_i32 = arith.constant 0 : i32
    %c0_i32_0 = arith.constant 0 : i32
    %c0_i32_1 = arith.constant 0 : i32
    return %c0_i32, %c0_i32_0 : i32, i32
  }
  func.func @transform_5(%arg0: i32) -> (i32, i32) {
    %c0_i32 = arith.constant 0 : i32
    %c0_i32_0 = arith.constant 0 : i32
    return %c0_i32, %arg0 : i32, i32
  }
}

</mosaic_0001>

<llo_original>
// kernel: mlp_forward.1
$region0: #{mlp_forward.1}
  #allocation0 [shape = 'u32[]', space=smem, size = 0x4, offset = 0x4, fixed_abs, tag = 'smem constant byte address 0x4 - core index']
  #allocation1 [shape = 'u32[144,128]{1,0:T(1,128)}', space=vmem, size = 0x12000, scoped, tag = 'internal scratch']
  %s0 = inlined_call_operand.vmem [shape: f32[1,8], index: 0, kind: input, shape index: {}]
  %s1 = inlined_call_operand.vmem [shape: f32[128,1], index: 1, kind: input, shape index: {}]
  %s2 = inlined_call_operand.vmem [shape: f32[128,1], index: 2, kind: input, shape index: {}]
  %s3 = inlined_call_operand.vmem [shape: f32[8,128], index: 3, kind: input, shape index: {}]
  %s4 = inlined_call_operand.vmem [shape: f32[8,1], index: 4, kind: input, shape index: {}]
  %s5 = inlined_call_operand.vmem [shape: f32[8,8], index: 5, kind: output, shape index: {}]
  %s6 = sld [smem:[#allocation0]]
  $region30: #{mlp_forward.1} parent=0
    _
  %s8 = ssub.s32 1, %s6
  %s9 = scalar_select 0, %s8, %s6
  // Predicated region
  $region2: #{mlp_forward.1} parent=0 // pred_check
    _
  $region3: #{mlp_forward.1} parent=0 // pred_check_branch
    %11 = sbr.rel (0) target = $region5
  $region4: #{mlp_forward.1} parent=0 // pred_region
    _
  $region5: #{mlp_forward.1} parent=0 // pred_fallthru
    _
  // Predicated region
  $region6: #{mlp_forward.1} parent=0 // pred_check
    _
  $region7: #{mlp_forward.1} parent=0 // pred_check_branch
    %13 = sbr.rel (0) target = $region9
  $region8: #{mlp_forward.1} parent=0 // pred_region
    _
  $region9: #{mlp_forward.1} parent=0 // pred_fallthru
    _
  // Predicated region
  $region10: #{mlp_forward.1} parent=0 // pred_check
    _
  $region11: #{mlp_forward.1} parent=0 // pred_check_branch
    %15 = sbr.rel (0) target = $region13
  $region12: #{mlp_forward.1} parent=0 // pred_region
    _
  $region13: #{mlp_forward.1} parent=0 // pred_fallthru
    _
  // Predicated region
  $region14: #{mlp_forward.1} parent=0 // pred_check
    _
  $region15: #{mlp_forward.1} parent=0 // pred_check_branch
    %17 = sbr.rel (0) target = $region17
  $region16: #{mlp_forward.1} parent=0 // pred_region
    _
  $region17: #{mlp_forward.1} parent=0 // pred_fallthru
    _
  // Predicated region
  $region18: #{mlp_forward.1} parent=0 // pred_check
    _
  $region19: #{mlp_forward.1} parent=0 // pred_check_branch
    %19 = sbr.rel (0) target = $region21
  $region20: #{mlp_forward.1} parent=0 // pred_region
    _
  $region21: #{mlp_forward.1} parent=0 // pred_fallthru
    _
  %v20 = vld [vmem:[%s0] sm:$0x1]
  %v21 = vld [vmem:[%s1] sm:$0xff]
  %v22 = vld [vmem:[%s1 + $0x8] sm:$0xff]
  %v23 = vld [vmem:[%s1 + $0x10] sm:$0xff]
  %v24 = vld [vmem:[%s1 + $0x18] sm:$0xff]
  %v25 = vld [vmem:[%s1 + $0x20] sm:$0xff]
  %v26 = vld [vmem:[%s1 + $0x28] sm:$0xff]
  %v27 = vld [vmem:[%s1 + $0x30] sm:$0xff]
  %v28 = vld [vmem:[%s1 + $0x38] sm:$0xff]
  %v29 = vld [vmem:[%s1 + $0x40] sm:$0xff]
  %v30 = vld [vmem:[%s1 + $0x48] sm:$0xff]
  %v31 = vld [vmem:[%s1 + $0x50] sm:$0xff]
  %v32 = vld [vmem:[%s1 + $0x58] sm:$0xff]
  %v33 = vld [vmem:[%s1 + $0x60] sm:$0xff]
  %v34 = vld [vmem:[%s1 + $0x68] sm:$0xff]
  %v35 = vld [vmem:[%s1 + $0x70] sm:$0xff]
  %v36 = vld [vmem:[%s1 + $0x78] sm:$0xff]
  %38 = vset.pattern.permute.xlu0 0
  %39 = vperm.xlu0 %38, %v21
  %v40 = vpop.permute.xlu0 %39
  %43 = vset.pattern.permute.xlu0 0
  %44 = vperm.xlu0 %43, %v22
  %v45 = vpop.permute.xlu0 %44
  %48 = vset.pattern.permute.xlu0 0
  %49 = vperm.xlu0 %48, %v23
  %v50 = vpop.permute.xlu0 %49
  %53 = vset.pattern.permute.xlu0 0
  %54 = vperm.xlu0 %53, %v24
  %v55 = vpop.permute.xlu0 %54
  %58 = vset.pattern.permute.xlu0 0
  %59 = vperm.xlu0 %58, %v25
  %v60 = vpop.permute.xlu0 %59
  %63 = vset.pattern.permute.xlu0 0
  %64 = vperm.xlu0 %63, %v26
  %v65 = vpop.permute.xlu0 %64
  %68 = vset.pattern.permute.xlu0 0
  %69 = vperm.xlu0 %68, %v27
  %v70 = vpop.permute.xlu0 %69
  %73 = vset.pattern.permute.xlu0 0
  %74 = vperm.xlu0 %73, %v28
  %v75 = vpop.permute.xlu0 %74
  %78 = vset.pattern.permute.xlu0 0
  %79 = vperm.xlu0 %78, %v29
  %v80 = vpop.permute.xlu0 %79
  %83 = vset.pattern.permute.xlu0 0
  %84 = vperm.xlu0 %83, %v30
  %v85 = vpop.permute.xlu0 %84
  %88 = vset.pattern.permute.xlu0 0
  %89 = vperm.xlu0 %88, %v31
  %v90 = vpop.permute.xlu0 %89
  %93 = vset.pattern.permute.xlu0 0
  %94 = vperm.xlu0 %93, %v32
  %v95 = vpop.permute.xlu0 %94
  %98 = vset.pattern.permute.xlu0 0
  %99 = vperm.xlu0 %98, %v33
  %v100 = vpop.permute.xlu0 %99
  %103 = vset.pattern.permute.xlu0 0
  %104 = vperm.xlu0 %103, %v34
  %v105 = vpop.permute.xlu0 %104
  %108 = vset.pattern.permute.xlu0 0
  %109 = vperm.xlu0 %108, %v35
  %v110 = vpop.permute.xlu0 %109
  %113 = vset.pattern.permute.xlu0 0
  %114 = vperm.xlu0 %113, %v36
  %v115 = vpop.permute.xlu0 %114
  %v118 = vlaneseq
  %v119 = vshrl.u32 %v118, 7
  %v120 = vsub.s32 0, %v119
  %v121 = vrot.slane %v20, %v120
  %v123 = vmul.f32 %v40, %v121
  %v124 = vmul.f32 %v45, %v121
  %v125 = vmul.f32 %v50, %v121
  %v126 = vmul.f32 %v55, %v121
  %v127 = vmul.f32 %v60, %v121
  %v128 = vmul.f32 %v65, %v121
  %v129 = vmul.f32 %v70, %v121
  %v130 = vmul.f32 %v75, %v121
  %v131 = vmul.f32 %v80, %v121
  %v132 = vmul.f32 %v85, %v121
  %v133 = vmul.f32 %v90, %v121
  %v134 = vmul.f32 %v95, %v121
  %v135 = vmul.f32 %v100, %v121
  %v136 = vmul.f32 %v105, %v121
  %v137 = vmul.f32 %v110, %v121
  %v138 = vmul.f32 %v115, %v121
  %v139 = vld [vmem:[%s2] sm:$0xff]
  %v140 = vld [vmem:[%s2 + $0x8] sm:$0xff]
  %v141 = vld [vmem:[%s2 + $0x10] sm:$0xff]
  %v142 = vld [vmem:[%s2 + $0x18] sm:$0xff]
  %v143 = vld [vmem:[%s2 + $0x20] sm:$0xff]
  %v144 = vld [vmem:[%s2 + $0x28] sm:$0xff]
  %v145 = vld [vmem:[%s2 + $0x30] sm:$0xff]
  %v146 = vld [vmem:[%s2 + $0x38] sm:$0xff]
  %v147 = vld [vmem:[%s2 + $0x40] sm:$0xff]
  %v148 = vld [vmem:[%s2 + $0x48] sm:$0xff]
  %v149 = vld [vmem:[%s2 + $0x50] sm:$0xff]
  %v150 = vld [vmem:[%s2 + $0x58] sm:$0xff]
  %v151 = vld [vmem:[%s2 + $0x60] sm:$0xff]
  %v152 = vld [vmem:[%s2 + $0x68] sm:$0xff]
  %v153 = vld [vmem:[%s2 + $0x70] sm:$0xff]
  %v154 = vld [vmem:[%s2 + $0x78] sm:$0xff]
  %156 = vset.pattern.permute.xlu0 0
  %157 = vperm.xlu0 %156, %v139
  %v158 = vpop.permute.xlu0 %157
  %161 = vset.pattern.permute.xlu0 0
  %162 = vperm.xlu0 %161, %v140
  %v163 = vpop.permute.xlu0 %162
  %166 = vset.pattern.permute.xlu0 0
  %167 = vperm.xlu0 %166, %v141
  %v168 = vpop.permute.xlu0 %167
  %171 = vset.pattern.permute.xlu0 0
  %172 = vperm.xlu0 %171, %v142
  %v173 = vpop.permute.xlu0 %172
  %176 = vset.pattern.permute.xlu0 0
  %177 = vperm.xlu0 %176, %v143
  %v178 = vpop.permute.xlu0 %177
  %181 = vset.pattern.permute.xlu0 0
  %182 = vperm.xlu0 %181, %v144
  %v183 = vpop.permute.xlu0 %182
  %186 = vset.pattern.permute.xlu0 0
  %187 = vperm.xlu0 %186, %v145
  %v188 = vpop.permute.xlu0 %187
  %191 = vset.pattern.permute.xlu0 0
  %192 = vperm.xlu0 %191, %v146
  %v193 = vpop.permute.xlu0 %192
  %196 = vset.pattern.permute.xlu0 0
  %197 = vperm.xlu0 %196, %v147
  %v198 = vpop.permute.xlu0 %197
  %201 = vset.pattern.permute.xlu0 0
  %202 = vperm.xlu0 %201, %v148
  %v203 = vpop.permute.xlu0 %202
  %206 = vset.pattern.permute.xlu0 0
  %207 = vperm.xlu0 %206, %v149
  %v208 = vpop.permute.xlu0 %207
  %211 = vset.pattern.permute.xlu0 0
  %212 = vperm.xlu0 %211, %v150
  %v213 = vpop.permute.xlu0 %212
  %216 = vset.pattern.permute.xlu0 0
  %217 = vperm.xlu0 %216, %v151
  %v218 = vpop.permute.xlu0 %217
  %221 = vset.pattern.permute.xlu0 0
  %222 = vperm.xlu0 %221, %v152
  %v223 = vpop.permute.xlu0 %222
  %226 = vset.pattern.permute.xlu0 0
  %227 = vperm.xlu0 %226, %v153
  %v228 = vpop.permute.xlu0 %227
  %231 = vset.pattern.permute.xlu0 0
  %232 = vperm.xlu0 %231, %v154
  %v233 = vpop.permute.xlu0 %232
  %v235 = vadd.f32 %v123, %v158
  %v236 = vadd.f32 %v124, %v163
  %v237 = vadd.f32 %v125, %v168
  %v238 = vadd.f32 %v126, %v173
  %v239 = vadd.f32 %v127, %v178
  %v240 = vadd.f32 %v128, %v183
  %v241 = vadd.f32 %v129, %v188
  %v242 = vadd.f32 %v130, %v193
  %v243 = vadd.f32 %v131, %v198
  %v244 = vadd.f32 %v132, %v203
  %v245 = vadd.f32 %v133, %v208
  %v246 = vadd.f32 %v134, %v213
  %v247 = vadd.f32 %v135, %v218
  %v248 = vadd.f32 %v136, %v223
  %v249 = vadd.f32 %v137, %v228
  %v250 = vadd.f32 %v138, %v233
  %v251 = vmax.f32 %v235, 0.0
  %v252 = vmax.f32 %v236, 0.0
  %v253 = vmax.f32 %v237, 0.0
  %v254 = vmax.f32 %v238, 0.0
  %v255 = vmax.f32 %v239, 0.0
  %v256 = vmax.f32 %v240, 0.0
  %v257 = vmax.f32 %v241, 0.0
  %v258 = vmax.f32 %v242, 0.0
  %v259 = vmax.f32 %v243, 0.0
  %v260 = vmax.f32 %v244, 0.0
  %v261 = vmax.f32 %v245, 0.0
  %v262 = vmax.f32 %v246, 0.0
  %v263 = vmax.f32 %v247, 0.0
  %v264 = vmax.f32 %v248, 0.0
  %v265 = vmax.f32 %v249, 0.0
  %v266 = vmax.f32 %v250, 0.0
  %v267 = vld [vmem:[%s3] sm:$0xff]
  %v268 = vld [vmem:[%s4] sm:$0xff]
  %270 = vset.pattern.permute.xlu0 0
  %271 = vperm.xlu0 %270, %v268
  %v272 = vpop.permute.xlu0 %271
  %274 = vmatprep.subr.mxu0 0.0
  %275 = vmatpush1.msra.mxu0 %v251
  %276 = vmatprep.subr.mxu0 0.0
  %277 = vmatpush1.msra.mxu0 %v252
  %278 = vmatprep.subr.mxu0 0.0
  %279 = vmatpush1.msra.mxu0 %v253
  %280 = vmatprep.subr.mxu0 0.0
  %281 = vmatpush1.msra.mxu0 %v254
  %282 = vmatprep.subr.mxu0 0.0
  %283 = vmatpush1.msra.mxu0 %v255
  %284 = vmatprep.subr.mxu0 0.0
  %285 = vmatpush1.msra.mxu0 %v256
  %286 = vmatprep.subr.mxu0 0.0
  %287 = vmatpush1.msra.mxu0 %v257
  %288 = vmatprep.subr.mxu0 0.0
  %289 = vmatpush1.msra.mxu0 %v258
  %290 = vmatprep.subr.mxu0 0.0
  %291 = vmatpush1.msra.mxu0 %v259
  %292 = vmatprep.subr.mxu0 0.0
  %293 = vmatpush1.msra.mxu0 %v260
  %294 = vmatprep.subr.mxu0 0.0
  %295 = vmatpush1.msra.mxu0 %v261
  %296 = vmatprep.subr.mxu0 0.0
  %297 = vmatpush1.msra.mxu0 %v262
  %298 = vmatprep.subr.mxu0 0.0
  %299 = vmatpush1.msra.mxu0 %v263
  %300 = vmatprep.subr.mxu0 0.0
  %301 = vmatpush1.msra.mxu0 %v264
  %302 = vmatprep.subr.mxu0 0.0
  %303 = vmatpush1.msra.mxu0 %v265
  %304 = vmatprep.subr.mxu0 0.0
  %305 = vmatpush1.msra.mxu0 %v266
  %306 = vmatprep.subr.mxu0 0.0
  %307 = vmatpush1.msra.mxu0 0.0
  %308 = vmatprep.subr.mxu0 0.0
  %309 = vmatpush1.msra.mxu0 0.0
  %310 = vmatprep.subr.mxu0 0.0
  %311 = vmatpush1.msra.mxu0 0.0
  %312 = vmatprep.subr.mxu0 0.0
  %313 = vmatpush1.msra.mxu0 0.0
  %314 = vmatprep.subr.mxu0 0.0
  %315 = vmatpush1.msra.mxu0 0.0
  %316 = vmatprep.subr.mxu0 0.0
  %317 = vmatpush1.msra.mxu0 0.0
  %318 = vmatprep.subr.mxu0 0.0
  %319 = vmatpush1.msra.mxu0 0.0
  %320 = vmatprep.subr.mxu0 0.0
  %321 = vmatpush1.msra.mxu0 0.0
  %322 = vmatprep.subr.mxu0 0.0
  %323 = vmatpush1.msra.mxu0 0.0
  %324 = vmatprep.subr.mxu0 0.0
  %325 = vmatpush1.msra.mxu0 0.0
  %326 = vmatprep.subr.mxu0 0.0
  %327 = vmatpush1.msra.mxu0 0.0
  %328 = vmatprep.subr.mxu0 0.0
  %329 = vmatpush1.msra.mxu0 0.0
  %330 = vmatprep.subr.mxu0 0.0
  %331 = vmatpush1.msra.mxu0 0.0
  %332 = vmatprep.subr.mxu0 0.0
  %333 = vmatpush1.msra.mxu0 0.0
  %334 = vmatprep.subr.mxu0 0.0
  %335 = vmatpush1.msra.mxu0 0.0
  %336 = vmatprep.subr.mxu0 0.0
  %337 = vmatpush1.msra.mxu0 0.0
  %338 = vmatprep.mubr.f32.mxu0 0.0
  %339 = vmatmul.mubr.f32.gmra.mrb[0].mxu0 %v267
  %v340 = vpop.f32.mrb[0].mxu0
  %v341 = vadd.f32 %v272, %v340
  %v342 = vpop.f32.mrb[0].mxu0
  %343 = vdwg.mxu0
  %v344 = vmax.f32 %v341, 0.0
  %v345 = vlaneseq
  %v346 = vshrl.u32 %v345, 7
  %vm347 = vcmp.lt.s32.totalorder %v346, 2
  %v348 = vsel %vm347, %v344, -inf
  %v349 = vrot.slane %v348, 4
  %v350 = vmax.f32 %v348, %v349
  %v351 = vrot.slane %v350, 2
  %v352 = vmax.f32 %v350, %v351
  %v353 = vrot.slane %v352, 1
  %v354 = vmax.f32 %v352, %v353
  %v355 = vsub.f32 %v348, %v354
  %v356 = vmul.f32 %v355, 1.442695
  %v357 = vpow.pop %v356
  %v358 = vrot.slane %v357, 4
  %v359 = vadd.f32 %v357, %v358
  %v360 = vrot.slane %v359, 2
  %v361 = vadd.f32 %v359, %v360
  %v362 = vrot.slane %v361, 1
  %v363 = vadd.f32 %v361, %v362
  %v364 = vrcp.pop %v363
  %v365 = vmul.f32 %v357, %v364
  %366 = vst [vmem:[%s5] sm:$0xff] %v365
  // Predicated region
  $region22: #{mlp_forward.1} parent=0 // pred_check
    _
  $region23: #{mlp_forward.1} parent=0 // pred_check_branch
    %368 = sbr.rel (0) target = $region25
  $region24: #{mlp_forward.1} parent=0 // pred_region
    _
  $region25: #{mlp_forward.1} parent=0 // pred_fallthru
    _
  // Predicated region
  $region26: #{mlp_forward.1} parent=0 // pred_check
    _
  $region27: #{mlp_forward.1} parent=0 // pred_check_branch
    %370 = sbr.rel (0) target = $region29
  $region28: #{mlp_forward.1} parent=0 // pred_region
    _
  $region29: #{mlp_forward.1} parent=0 // pred_fallthru
    _

</llo_original>
